<compile_context>
chip_gen: v5e
topology: v5e:2x2
jax: 0.10.0
libtpu: 0.0.40
codegen_flags: <defaults>
</compile_context>

<pallas_src>
import functools

import jax
import jax.numpy as jnp
from jax.experimental import pallas as pl
from jax.experimental.pallas import tpu as pltpu


def _score_kpe_kernel(starts_ref, lens_ref, w_ref, b_ref, hidden_ref, out_ref,
                      *, seq_len, max_words, tb):
    """One grid step = `tb` batch elements.

    starts_ref : (B, W) int32    VMEM (full, resident)  word span start token index
    lens_ref   : (B, W) int32    VMEM (full, resident)  word span length in tokens (0 => padding word)
    w_ref      : (1, H) float32  VMEM (full)            score linear weight, lane-dense
    b_ref      : (1,)   float32  SMEM                   score linear bias
    hidden_ref : (tb, S, H) bf16 VMEM block             last_hidden_state[b*tb : (b+1)*tb]
    out_ref    : (tb, 1, W) f32  VMEM block             scores, W lane-dense
    """
    step = pl.program_id(0)
    w_row = w_ref[...]                                   # (1, H) f32, hoisted out of the loop
    bias = b_ref[0]                                      # scalar f32 from SMEM

    # Token-index iota for the (S, W) span mask; invariant across sub-batches -> hoisted.
    t_ids = jax.lax.broadcasted_iota(jnp.int32, (seq_len, max_words), 0)

    for i in range(tb):                                  # tb is small and static
        row = step * tb + i

        # 1) Per-token projection tok[t] = <hidden[t, :], w>  (VPU mul + lane reduce,
        #    f32 accumulation on bf16 input).  Produces a naturally (S, 1)-shaped column.
        hid = hidden_ref[i].astype(jnp.float32)                       # (S, H)
        tok = jnp.sum(hid * w_row, axis=-1, keepdims=True)            # (S, 1)

        # 2) Span-mean mask A[t, w] = 1/len_w if token t is inside word w's span else 0.
        starts = starts_ref[pl.ds(row, 1), :]                         # (1, W) int32
        lens = lens_ref[pl.ds(row, 1), :]                             # (1, W) int32
        in_span = (t_ids >= starts) & (t_ids < starts + lens) & (lens > 0)
        inv_len = 1.0 / jnp.maximum(lens, 1).astype(jnp.float32)      # (1, W)
        a = in_span.astype(jnp.float32) * inv_len                     # (S, W)

        # 3) Word score = sum_t A[t, w] * tok[t] + bias  (VPU mul + sublane reduce).
        #    Padding words (len == 0) get score == bias, matching Linear(0-embedding).
        score = jnp.sum(a * tok, axis=0, keepdims=True) + bias        # (1, W), lane-dense
        out_ref[i] = score.astype(out_ref.dtype)


def _pick_tb(batch, max_tb=8):
    """Largest divisor of `batch` (<= max_tb) that still leaves >= 2 grid steps,
    so the parallel batch axis can shard across both TensorCores on v7x."""
    best = 1
    for cand in range(1, min(max_tb, batch) + 1):
        if batch % cand == 0 and batch // cand >= 2:
            best = cand
    return best


def score_kpe_forward(last_hidden_state, word_starts, word_lens, score_w, score_b,
                      *, tb=None, cast_bf16=True):
    """Pallas-backed ScoreKpe forward (no kpe_label branch -> returns batch_score_list).

    last_hidden_state : (B, S, H) float32   SimCSE/BERT last hidden state
    word_starts       : (B, W) int32        word span start token index
    word_lens         : (B, W) int32        word span length (0 => padding word)
    score_w           : (H, 1) float32      nn.Linear(hidden_size, 1) weight (as x @ w)
    score_b           : (1, 1) float32      nn.Linear bias
    returns           : (B, W, 1) float32   matching PyTorch's [B, max_word_count, 1]
    """
    B, S, H = last_hidden_state.shape
    W = word_starts.shape[1]

    if tb is None:
        tb = _pick_tb(B)
    assert B % tb == 0, "batch must be divisible by tb"

    # Halve the dominant HBM read; f32 accumulation happens inside the kernel.
    hidden = last_hidden_state.astype(jnp.bfloat16) if cast_bf16 else last_hidden_state
    w_row = score_w.reshape(1, H).astype(jnp.float32)          # lane-dense weight vector
    bias = score_b.reshape(-1)[:1].astype(jnp.float32)         # (1,) scalar for SMEM

    kernel = functools.partial(_score_kpe_kernel, seq_len=S, max_words=W, tb=tb)

    out = pl.pallas_call(
        kernel,
        out_shape=jax.ShapeDtypeStruct((B, 1, W), jnp.float32),
        grid=(B // tb,),
        in_specs=[
            pl.BlockSpec((B, W), lambda b: (0, 0)),                # word_starts (full, resident)
            pl.BlockSpec((B, W), lambda b: (0, 0)),                # word_lens   (full, resident)
            pl.BlockSpec((1, H), lambda b: (0, 0)),                # score weight (1, H)
            pl.BlockSpec(memory_space=pltpu.MemorySpace.SMEM),     # score bias scalar
            pl.BlockSpec((tb, S, H), lambda b: (b, 0, 0)),         # hidden block: tb batch rows
        ],
        out_specs=pl.BlockSpec((tb, 1, W), lambda b: (b, 0, 0)),   # lane-dense (W last) output
        compiler_params=pltpu.CompilerParams(
            dimension_semantics=("parallel",)),
    )(word_starts, word_lens, w_row, bias, hidden)

    # Match PyTorch's [B, max_word_count, 1] layout (free wrapper plumbing).
    return out.reshape(B, W, 1)


def _reference_forward(last_hidden_state, word_starts, word_lens, score_w, score_b):
    """Pure-JAX reference of the PyTorch semantics: span-mean -> pad -> linear."""
    B, S, H = last_hidden_state.shape
    t = jnp.arange(S)
    in_span = ((t[None, None, :] >= word_starts[:, :, None])
               & (t[None, None, :] < (word_starts + word_lens)[:, :, None])
               & (word_lens[:, :, None] > 0))
    a = in_span.astype(jnp.float32) / jnp.maximum(word_lens, 1)[:, :, None].astype(jnp.float32)
    em = jnp.einsum('bws,bsh->bwh', a, last_hidden_state)
    return em @ score_w + score_b.reshape(())


if __name__ == "__main__":
    # Small shapes: batch=4, seq=16, hidden=32, max_word_count=8
    B, S, H, W = 4, 16, 32, 8

    key = jax.random.PRNGKey(0)
    k_hidden, k_w, k_b = jax.random.split(key, 3)

    # Synthetic SimCSE last_hidden_state (encoder itself is not translated).
    last_hidden_state = jax.random.normal(k_hidden, (B, S, H), dtype=jnp.float32)

    # Word segments as (start, length) token spans per word; length 0 == padding word
    # (mirrors F.pad to max_word_count in the PyTorch code).
    word_starts = jnp.array(
        [[1, 3, 4, 7, 9, 0, 0, 0],
         [1, 2, 5, 0, 0, 0, 0, 0],
         [0, 2, 3, 6, 10, 12, 0, 0],
         [2, 4, 8, 11, 0, 0, 0, 0]], dtype=jnp.int32)
    word_lens = jnp.array(
        [[2, 1, 3, 2, 1, 0, 0, 0],
         [1, 3, 2, 0, 0, 0, 0, 0],
         [2, 1, 3, 4, 2, 1, 0, 0],
         [2, 4, 3, 2, 0, 0, 0, 0]], dtype=jnp.int32)

    # nn.Linear(hidden_size, 1) parameters, deterministic init.
    score_w = jax.random.normal(k_w, (H, 1), dtype=jnp.float32) / jnp.sqrt(H)
    score_b = jax.random.normal(k_b, (1, 1), dtype=jnp.float32) * 0.01

    scores = score_kpe_forward(last_hidden_state, word_starts, word_lens, score_w, score_b)
    scores = jax.block_until_ready(scores)
    assert scores.shape == (B, W, 1)

    # Exact check: compare against the reference run on the same bf16-quantized hidden
    # (verifies the kernel math independent of the intentional bf16 input cast).
    hidden_q = last_hidden_state.astype(jnp.bfloat16).astype(jnp.float32)
    expected_q = _reference_forward(hidden_q, word_starts, word_lens, score_w, score_b)
    assert jnp.allclose(scores, expected_q, atol=1e-4, rtol=1e-4), (scores, expected_q)

    # Drift vs. the full-f32 PyTorch-equivalent path stays at bf16 quantization level.
    expected_f32 = _reference_forward(last_hidden_state, word_starts, word_lens, score_w, score_b)
    assert jnp.allclose(scores, expected_f32, atol=5e-2, rtol=5e-2), (scores, expected_f32)

    print("KERNEL_OK")
</pallas_src>

<mosaic_0001>
module attributes {stable_mosaic.version = 11 : i64} {
  func.func @_score_kpe_kernel(%arg0: i32, %arg1: memref<4x8xi32, #tpu.memory_space<vmem>>, %arg2: memref<4x8xi32, #tpu.memory_space<vmem>>, %arg3: memref<1x32xf32, #tpu.memory_space<vmem>>, %arg4: memref<1xf32, #tpu.memory_space<smem>>, %arg5: memref<2x16x32xbf16, #tpu.memory_space<vmem>>, %arg6: memref<2x1x8xf32, #tpu.memory_space<vmem>>) attributes {dimension_semantics = [#tpu.dimension_semantics<parallel>], iteration_bounds = array<i64: 2>, scalar_prefetch = 0 : i64, scratch_operands = 0 : i64, tpu.core_type = #tpu.core_type<tc>, window_params = [{pipeline_mode = #tpu.pipeline_mode<synchronous>, transform_indices = @transform_0, window_bounds = array<i64: 4, 8>}, {pipeline_mode = #tpu.pipeline_mode<synchronous>, transform_indices = @transform_1, window_bounds = array<i64: 4, 8>}, {pipeline_mode = #tpu.pipeline_mode<synchronous>, transform_indices = @transform_2, window_bounds = array<i64: 1, 32>}, {transform_indices = @transform_3, window_bounds = array<i64: 1>}, {transform_indices = @transform_4, window_bounds = array<i64: 2, 16, 32>}, {transform_indices = @transform_5, window_bounds = array<i64: 2, 1, 8>}]} {
    %c0 = arith.constant 0 : index
    %c0_0 = arith.constant 0 : index
    %0 = vector.load %arg3[%c0, %c0_0] : memref<1x32xf32, #tpu.memory_space<vmem>>, vector<1x32xf32>
    %c0_1 = arith.constant 0 : index
    %1 = memref.load %arg4[%c0_1] : memref<1xf32, #tpu.memory_space<smem>>
    %2 = tpu.iota {dimensions = array<i32: 0>} : vector<16x8xi32>
    %c2_i32 = arith.constant 2 : i32
    %3 = arith.muli %arg0, %c2_i32 : i32
    %c0_i32 = arith.constant 0 : i32
    %4 = arith.addi %3, %c0_i32 : i32
    %c0_2 = arith.constant 0 : index
    %c0_3 = arith.constant 0 : index
    %c0_4 = arith.constant 0 : index
    %5 = vector.load %arg5[%c0_2, %c0_3, %c0_4] : memref<2x16x32xbf16, #tpu.memory_space<vmem>>, vector<1x16x32xbf16>
    %6 = vector.shape_cast %5 : vector<1x16x32xbf16> to vector<16x32xbf16>
    %7 = arith.extf %6 : vector<16x32xbf16> to vector<16x32xf32>
    %8 = vector.broadcast %0 : vector<1x32xf32> to vector<16x32xf32>
    %9 = arith.mulf %7, %8 : vector<16x32xf32>
    %cst = arith.constant dense<0.000000e+00> : vector<16xf32>
    %10 = vector.multi_reduction <add>, %9, %cst [1] : vector<16x32xf32> to vector<16xf32>
    %11 = vector.shape_cast %10 : vector<16xf32> to vector<16x1xf32>
    %12 = arith.index_cast %4 : i32 to index
    %c0_5 = arith.constant 0 : index
    %13 = vector.load %arg1[%12, %c0_5] : memref<4x8xi32, #tpu.memory_space<vmem>>, vector<1x8xi32>
    %14 = arith.index_cast %4 : i32 to index
    %c0_6 = arith.constant 0 : index
    %15 = vector.load %arg2[%14, %c0_6] : memref<4x8xi32, #tpu.memory_space<vmem>>, vector<1x8xi32>
    %16 = vector.broadcast %13 : vector<1x8xi32> to vector<16x8xi32>
    %17 = arith.cmpi sge, %2, %16 : vector<16x8xi32>
    %18 = arith.addi %13, %15 : vector<1x8xi32>
    %19 = vector.broadcast %18 : vector<1x8xi32> to vector<16x8xi32>
    %20 = arith.cmpi slt, %2, %19 : vector<16x8xi32>
    %21 = arith.andi %17, %20 : vector<16x8xi1>
    %c0_i32_7 = arith.constant 0 : i32
    %22 = vector.broadcast %c0_i32_7 : i32 to vector<1x8xi32>
    %23 = arith.cmpi sgt, %15, %22 : vector<1x8xi32>
    %24 = vector.broadcast %23 : vector<1x8xi1> to vector<16x8xi1>
    %25 = arith.andi %21, %24 : vector<16x8xi1>
    %c1_i32 = arith.constant 1 : i32
    %26 = vector.broadcast %c1_i32 : i32 to vector<1x8xi32>
    %27 = arith.maxsi %15, %26 : vector<1x8xi32>
    %28 = arith.sitofp %27 : vector<1x8xi32> to vector<1x8xf32>
    %cst_8 = arith.constant 1.000000e+00 : f32
    %29 = vector.broadcast %cst_8 : f32 to vector<1x8xf32>
    %30 = arith.divf %29, %28 : vector<1x8xf32>
    %31 = arith.extui %25 : vector<16x8xi1> to vector<16x8xi32>
    %32 = arith.sitofp %31 : vector<16x8xi32> to vector<16x8xf32>
    %33 = vector.broadcast %30 : vector<1x8xf32> to vector<16x8xf32>
    %34 = arith.mulf %32, %33 : vector<16x8xf32>
    %35 = vector.broadcast %11 : vector<16x1xf32> to vector<16x8xf32>
    %36 = arith.mulf %34, %35 : vector<16x8xf32>
    %cst_9 = arith.constant dense<0.000000e+00> : vector<8xf32>
    %37 = vector.multi_reduction <add>, %36, %cst_9 [0] : vector<16x8xf32> to vector<8xf32>
    %38 = vector.shape_cast %37 : vector<8xf32> to vector<1x8xf32>
    %39 = vector.broadcast %1 : f32 to vector<1x8xf32>
    %40 = arith.addf %38, %39 : vector<1x8xf32>
    %c0_10 = arith.constant 0 : index
    %c0_11 = arith.constant 0 : index
    %c0_12 = arith.constant 0 : index
    %41 = vector.load %arg6[%c0_10, %c0_11, %c0_12] : memref<2x1x8xf32, #tpu.memory_space<vmem>>, vector<1x1x8xf32>
    %42 = vector.shape_cast %41 : vector<1x1x8xf32> to vector<1x8xf32>
    %43 = vector.shape_cast %40 : vector<1x8xf32> to vector<1x1x8xf32>
    tpu.vector_store %arg6[%c0_10, %c0_11, %c0_12], %43 {strides = array<i32>} : memref<2x1x8xf32, #tpu.memory_space<vmem>>, vector<1x1x8xf32>,
    %c2_i32_13 = arith.constant 2 : i32
    %44 = arith.muli %arg0, %c2_i32_13 : i32
    %c1_i32_14 = arith.constant 1 : i32
    %45 = arith.addi %44, %c1_i32_14 : i32
    %c1 = arith.constant 1 : index
    %c0_15 = arith.constant 0 : index
    %c0_16 = arith.constant 0 : index
    %46 = vector.load %arg5[%c1, %c0_15, %c0_16] : memref<2x16x32xbf16, #tpu.memory_space<vmem>>, vector<1x16x32xbf16>
    %47 = vector.shape_cast %46 : vector<1x16x32xbf16> to vector<16x32xbf16>
    %48 = arith.extf %47 : vector<16x32xbf16> to vector<16x32xf32>
    %49 = vector.broadcast %0 : vector<1x32xf32> to vector<16x32xf32>
    %50 = arith.mulf %48, %49 : vector<16x32xf32>
    %cst_17 = arith.constant dense<0.000000e+00> : vector<16xf32>
    %51 = vector.multi_reduction <add>, %50, %cst_17 [1] : vector<16x32xf32> to vector<16xf32>
    %52 = vector.shape_cast %51 : vector<16xf32> to vector<16x1xf32>
    %53 = arith.index_cast %45 : i32 to index
    %c0_18 = arith.constant 0 : index
    %54 = vector.load %arg1[%53, %c0_18] : memref<4x8xi32, #tpu.memory_space<vmem>>, vector<1x8xi32>
    %55 = arith.index_cast %45 : i32 to index
    %c0_19 = arith.constant 0 : index
    %56 = vector.load %arg2[%55, %c0_19] : memref<4x8xi32, #tpu.memory_space<vmem>>, vector<1x8xi32>
    %57 = vector.broadcast %54 : vector<1x8xi32> to vector<16x8xi32>
    %58 = arith.cmpi sge, %2, %57 : vector<16x8xi32>
    %59 = arith.addi %54, %56 : vector<1x8xi32>
    %60 = vector.broadcast %59 : vector<1x8xi32> to vector<16x8xi32>
    %61 = arith.cmpi slt, %2, %60 : vector<16x8xi32>
    %62 = arith.andi %58, %61 : vector<16x8xi1>
    %c0_i32_20 = arith.constant 0 : i32
    %63 = vector.broadcast %c0_i32_20 : i32 to vector<1x8xi32>
    %64 = arith.cmpi sgt, %56, %63 : vector<1x8xi32>
    %65 = vector.broadcast %64 : vector<1x8xi1> to vector<16x8xi1>
    %66 = arith.andi %62, %65 : vector<16x8xi1>
    %c1_i32_21 = arith.constant 1 : i32
    %67 = vector.broadcast %c1_i32_21 : i32 to vector<1x8xi32>
    %68 = arith.maxsi %56, %67 : vector<1x8xi32>
    %69 = arith.sitofp %68 : vector<1x8xi32> to vector<1x8xf32>
    %cst_22 = arith.constant 1.000000e+00 : f32
    %70 = vector.broadcast %cst_22 : f32 to vector<1x8xf32>
    %71 = arith.divf %70, %69 : vector<1x8xf32>
    %72 = arith.extui %66 : vector<16x8xi1> to vector<16x8xi32>
    %73 = arith.sitofp %72 : vector<16x8xi32> to vector<16x8xf32>
    %74 = vector.broadcast %71 : vector<1x8xf32> to vector<16x8xf32>
    %75 = arith.mulf %73, %74 : vector<16x8xf32>
    %76 = vector.broadcast %52 : vector<16x1xf32> to vector<16x8xf32>
    %77 = arith.mulf %75, %76 : vector<16x8xf32>
    %cst_23 = arith.constant dense<0.000000e+00> : vector<8xf32>
    %78 = vector.multi_reduction <add>, %77, %cst_23 [0] : vector<16x8xf32> to vector<8xf32>
    %79 = vector.shape_cast %78 : vector<8xf32> to vector<1x8xf32>
    %80 = vector.broadcast %1 : f32 to vector<1x8xf32>
    %81 = arith.addf %79, %80 : vector<1x8xf32>
    %c1_24 = arith.constant 1 : index
    %c0_25 = arith.constant 0 : index
    %c0_26 = arith.constant 0 : index
    %82 = vector.load %arg6[%c1_24, %c0_25, %c0_26] : memref<2x1x8xf32, #tpu.memory_space<vmem>>, vector<1x1x8xf32>
    %83 = vector.shape_cast %82 : vector<1x1x8xf32> to vector<1x8xf32>
    %84 = vector.shape_cast %81 : vector<1x8xf32> to vector<1x1x8xf32>
    tpu.vector_store %arg6[%c1_24, %c0_25, %c0_26], %84 {strides = array<i32>} : memref<2x1x8xf32, #tpu.memory_space<vmem>>, vector<1x1x8xf32>,
    return
  }
  func.func @transform_0(%arg0: i32) -> (i32, i32) {
    %c0_i32 = arith.constant 0 : i32
    %c0_i32_0 = arith.constant 0 : i32
    %c0_i32_1 = arith.constant 0 : i32
    return %c0_i32, %c0_i32_0 : i32, i32
  }
  func.func @transform_1(%arg0: i32) -> (i32, i32) {
    %c0_i32 = arith.constant 0 : i32
    %c0_i32_0 = arith.constant 0 : i32
    %c0_i32_1 = arith.constant 0 : i32
    return %c0_i32, %c0_i32_0 : i32, i32
  }
  func.func @transform_2(%arg0: i32) -> (i32, i32) {
    %c0_i32 = arith.constant 0 : i32
    %c0_i32_0 = arith.constant 0 : i32
    %c0_i32_1 = arith.constant 0 : i32
    return %c0_i32, %c0_i32_0 : i32, i32
  }
  func.func @transform_3(%arg0: i32) -> i32 {
    %c0_i32 = arith.constant 0 : i32
    %c0_i32_0 = arith.constant 0 : i32
    return %c0_i32 : i32
  }
  func.func @transform_4(%arg0: i32) -> (i32, i32, i32) {
    %c0_i32 = arith.constant 0 : i32
    %c0_i32_0 = arith.constant 0 : i32
    %c0_i32_1 = arith.constant 0 : i32
    return %arg0, %c0_i32, %c0_i32_0 : i32, i32, i32
  }
  func.func @transform_5(%arg0: i32) -> (i32, i32, i32) {
    %c0_i32 = arith.constant 0 : i32
    %c0_i32_0 = arith.constant 0 : i32
    %c0_i32_1 = arith.constant 0 : i32
    return %arg0, %c0_i32, %c0_i32_0 : i32, i32, i32
  }
}

</mosaic_0001>

<llo_original>
// kernel: tpu_custom_call.1
$region0: #{tpu_custom_call.1}
  #allocation0 [shape = 'u32[]', space=smem, size = 0x4, offset = 0x4, fixed_abs, tag = 'smem constant byte address 0x4 - core index']
  #allocation1 [shape = 'u32[72,128]{1,0:T(1,128)}', space=vmem, size = 0x9000, scoped, tag = 'internal scratch']
  #allocation2 [shape = 'f32[1]{0:T(128)S(6)}', space=smem, size = 0x200, scoped, tag = 'scoped memory for tpu_custom_call.1']
  %s0 = inlined_call_operand.hbm [shape: s32[4,8], index: 0, kind: input, shape index: {}]
  %s1 = inlined_call_operand.hbm [shape: s32[4,8], index: 1, kind: input, shape index: {}]
  %s2 = inlined_call_operand.vmem [shape: f32[1,32], index: 2, kind: input, shape index: {}]
  %s3 = inlined_call_operand.<no memory space> [shape: f32[1], index: 3, kind: input, shape index: {}]
  %s4 = inlined_call_operand.hbm [shape: bf16[4,16,32], index: 4, kind: input, shape index: {}]
  %s5 = inlined_call_operand.hbm [shape: f32[4,1,8], index: 5, kind: output, shape index: {}]
  %s6 = sld [smem:[#allocation0]]
  $region65: #{tpu_custom_call.1} parent=0
    _
  %s8 = ssub.s32 1, %s6
  %s9 = scalar_select 0, %s8, %s6
  %10 = sst [smem:[#allocation2]] %s3
  $region1: #{tpu_custom_call.1} parent=0
    #allocation3 [shape = 'u8[2048]{0}', space=vmem, size = 0x800, scoped, tag = 'input window, operand 0, single buffered']
    #allocation4 [shape = 's32[2]{0}', space=sflag, size = 0x8, scoped, tag = 'scoped memory for tpu_custom_call.1']
    #allocation5 [shape = 's32[2]{0}', space=sflag, size = 0x8, scoped, tag = 'scoped memory for tpu_custom_call.1']
    #allocation6 [shape = 'u8[2048]{0}', space=vmem, size = 0x800, scoped, tag = 'input window, operand 1, single buffered']
    #allocation7 [shape = 's32[1]{0}', space=sflag, size = 0x4, scoped, tag = 'scoped memory for tpu_custom_call.1']
    #allocation8 [shape = 'u8[16384]{0}', space=vmem, size = 0x4000, scoped, tag = 'input window, operand 4']
    #allocation9 [shape = 'u8[2048]{0}', space=vmem, size = 0x800, scoped, tag = 'output window, operand 0']
    %11 = vsyncpa [#allocation4], 0
    %12 = vsyncpa [#allocation7], 0
    %13 = vsyncpa [#allocation5], 0
    %s14 = scalar_lea.sflag [#allocation5], 1
    %15 = vsyncpa %s14, 0
    loop: start=0, step=1, limit=4
    $region2: #{tpu_custom_call.1} parent=1 // loop_pre_header
      _
    $region3: #{tpu_custom_call.1} parent=1 // loop_header
      %s17 = sphi 0, %s21
      %p18 = scmp.ge.s32.totalorder %s17, 4
      %s25 = sphi 0, %s25
      %s27 = sphi 0, %s25
      %s28 = sphi 0, %s27
      %s42 = sphi 0, %s28
      %s46 = sphi 0, %s46
      %s48 = sphi 0, %s46
      %s49 = sphi 0, %s48
      %s63 = sphi 0, %s49
      %s67 = sphi 0, %s67
      %s69 = sphi 0, %s67
      %s70 = sphi 0, %s69
      %s84 = sphi 0, %s70
      %s88 = sphi 0, %s88
      %s90 = sphi 0, %s88
      %s91 = sphi 0, %s90
      %s105 = sphi 0, %s91
      %s111 = sphi 0, %s113
      %s114 = sphi 0, %s111
      %s115 = sphi 0, %s114
      %s131 = sphi 0, %s115
      %s137 = sphi 0, %s139
      %s140 = sphi 0, %s137
      %s141 = sphi 0, %s140
      %s157 = sphi 0, %s141
    $region4: #{tpu_custom_call.1} parent=1 // loop_header_branch
      %20 = sbr.rel (%p18) target = $region8
    $region5: #{tpu_custom_call.1} parent=1 // loop_body
      %s22 = ssub.s32 %s17, 1
      %s23 = ssub.s32 %s17, 2
      %s24 = sadd.s32 %s17, 1
      %s26 = sadd.s32 %s25, 1
      %p29 = scmp.eq.s32.totalorder %s17, 1
      %p30 = scmp.ne.s32.totalorder %s25, %s27
      %p31 = scmp.eq.s32.totalorder %s17, 0
      %p32 = por %p30, %p31
      %p33 = scmp.ne.s32.totalorder %s25, %s27
      %p34 = scmp.eq.s32.totalorder %s22, 1
      %p35 = por %p33, %p34
      %p36 = scmp.ne.s32.totalorder %s27, %s28
      %p37 = scmp.eq.s32.totalorder %s22, 0
      %p38 = por %p36, %p37
      %p39 = scmp.ne.s32.totalorder %s27, %s28
      %p40 = scmp.eq.s32.totalorder %s23, 1
      %p41 = por %p39, %p40
      %p43 = scmp.ne.s32.totalorder %s28, %s42
      %p44 = scmp.eq.s32.totalorder %s23, 0
      %p45 = por %p43, %p44
      %s47 = sadd.s32 %s46, 1
      %p50 = scmp.eq.s32.totalorder %s17, 1
      %p51 = scmp.ne.s32.totalorder %s46, %s48
      %p52 = scmp.eq.s32.totalorder %s17, 0
      %p53 = por %p51, %p52
      %p54 = scmp.ne.s32.totalorder %s46, %s48
      %p55 = scmp.eq.s32.totalorder %s22, 1
      %p56 = por %p54, %p55
      %p57 = scmp.ne.s32.totalorder %s48, %s49
      %p58 = scmp.eq.s32.totalorder %s22, 0
      %p59 = por %p57, %p58
      %p60 = scmp.ne.s32.totalorder %s48, %s49
      %p61 = scmp.eq.s32.totalorder %s23, 1
      %p62 = por %p60, %p61
      %p64 = scmp.ne.s32.totalorder %s49, %s63
      %p65 = scmp.eq.s32.totalorder %s23, 0
      %p66 = por %p64, %p65
      %s68 = sadd.s32 %s67, 1
      %p71 = scmp.eq.s32.totalorder %s17, 1
      %p72 = scmp.ne.s32.totalorder %s67, %s69
      %p73 = scmp.eq.s32.totalorder %s17, 0
      %p74 = por %p72, %p73
      %p75 = scmp.ne.s32.totalorder %s67, %s69
      %p76 = scmp.eq.s32.totalorder %s22, 1
      %p77 = por %p75, %p76
      %p78 = scmp.ne.s32.totalorder %s69, %s70
      %p79 = scmp.eq.s32.totalorder %s22, 0
      %p80 = por %p78, %p79
      %p81 = scmp.ne.s32.totalorder %s69, %s70
      %p82 = scmp.eq.s32.totalorder %s23, 1
      %p83 = por %p81, %p82
      %p85 = scmp.ne.s32.totalorder %s70, %s84
      %p86 = scmp.eq.s32.totalorder %s23, 0
      %p87 = por %p85, %p86
      %s89 = sadd.s32 %s88, 1
      %p92 = scmp.eq.s32.totalorder %s17, 1
      %p93 = scmp.ne.s32.totalorder %s88, %s90
      %p94 = scmp.eq.s32.totalorder %s17, 0
      %p95 = por %p93, %p94
      %p96 = scmp.ne.s32.totalorder %s88, %s90
      %p97 = scmp.eq.s32.totalorder %s22, 1
      %p98 = por %p96, %p97
      %p99 = scmp.ne.s32.totalorder %s90, %s91
      %p100 = scmp.eq.s32.totalorder %s22, 0
      %p101 = por %p99, %p100
      %p102 = scmp.ne.s32.totalorder %s90, %s91
      %p103 = scmp.eq.s32.totalorder %s23, 1
      %p104 = por %p102, %p103
      %p106 = scmp.ne.s32.totalorder %s91, %s105
      %p107 = scmp.eq.s32.totalorder %s23, 0
      %p108 = por %p106, %p107
      %s109 = ssub.s32 %s17, %s24
      %p110 = scmp.eq.s32.totalorder %s109, 0
      %s112 = sadd.s32 %s111, 1
      %s113 = scalar_select %p110, %s111, %s112
      %p116 = pneg %p110
      %p117 = scmp.eq.s32.totalorder %s17, 1
      %p118 = por %p116, %p117
      %p119 = scmp.ne.s32.totalorder %s111, %s114
      %p120 = scmp.eq.s32.totalorder %s17, 0
      %p121 = por %p119, %p120
      %p122 = scmp.ne.s32.totalorder %s111, %s114
      %p123 = scmp.eq.s32.totalorder %s22, 1
      %p124 = por %p122, %p123
      %p125 = scmp.ne.s32.totalorder %s114, %s115
      %p126 = scmp.eq.s32.totalorder %s22, 0
      %p127 = por %p125, %p126
      %p128 = scmp.ne.s32.totalorder %s114, %s115
      %p129 = scmp.eq.s32.totalorder %s23, 1
      %p130 = por %p128, %p129
      %p132 = scmp.ne.s32.totalorder %s115, %s131
      %p133 = scmp.eq.s32.totalorder %s23, 0
      %p134 = por %p132, %p133
      %s135 = ssub.s32 %s17, %s24
      %p136 = scmp.eq.s32.totalorder %s135, 0
      %s138 = sadd.s32 %s137, 1
      %s139 = scalar_select %p136, %s137, %s138
      %p142 = pneg %p136
      %p143 = scmp.eq.s32.totalorder %s17, 1
      %p144 = por %p142, %p143
      %p145 = scmp.ne.s32.totalorder %s137, %s140
      %p146 = scmp.eq.s32.totalorder %s17, 0
      %p147 = por %p145, %p146
      %p148 = scmp.ne.s32.totalorder %s137, %s140
      %p149 = scmp.eq.s32.totalorder %s22, 1
      %p150 = por %p148, %p149
      %p151 = scmp.ne.s32.totalorder %s140, %s141
      %p152 = scmp.eq.s32.totalorder %s22, 0
      %p153 = por %p151, %p152
      %p154 = scmp.ne.s32.totalorder %s140, %s141
      %p155 = scmp.eq.s32.totalorder %s23, 1
      %p156 = por %p154, %p155
      %p158 = scmp.ne.s32.totalorder %s141, %s157
      %p159 = scmp.eq.s32.totalorder %s23, 0
      %p160 = por %p158, %p159
      %p161 = scmp.le.s32.totalorder 1, %s17
      %p162 = scmp.lt.s32.totalorder %s17, 3
      %p163 = pnand %p161, %p162
      %p164 = pneg %p163
      // Predicated region
      $region9: #{tpu_custom_call.1} parent=5 // pred_check
        _
      $region10: #{tpu_custom_call.1} parent=5 // pred_check_branch
        %166 = sbr.rel (%p163) target = $region12
      $region11: #{tpu_custom_call.1} parent=5 // pred_region
        %s167 = ssub.s32 %s17, 1
        // Predicated region
        $region13: #{tpu_custom_call.1} parent=11 // pred_check
          %p168 = pneg %p38
        $region14: #{tpu_custom_call.1} parent=11 // pred_check_branch
          %170 = sbr.rel (%p168) target = $region16
        $region15: #{tpu_custom_call.1} parent=11 // pred_region
          %172 = vsyncadd [#allocation4], 0
          %s174 = sshll.u32 %s0, 4
          %s175 = int_to_ptr.hbm [resolvable:$true] %s174
          %s176 = sshll.u32 [#allocation3], 4
          %s177 = int_to_ptr.vmem [resolvable:$true] %s176
          %179 = dma.hbm_to_vmem [thread:$0]  %s175, 64, %s177, [#allocation4]
        $region16: #{tpu_custom_call.1} parent=11 // pred_fallthru
          _
        // Predicated region
        $region17: #{tpu_custom_call.1} parent=11 // pred_check
          %p180 = pneg %p59
        $region18: #{tpu_custom_call.1} parent=11 // pred_check_branch
          %182 = sbr.rel (%p180) target = $region20
        $region19: #{tpu_custom_call.1} parent=11 // pred_region
          %184 = vsyncadd [#allocation7], 0
          %s186 = sshll.u32 %s1, 4
          %s187 = int_to_ptr.hbm [resolvable:$true] %s186
          %s188 = sshll.u32 [#allocation6], 4
          %s189 = int_to_ptr.vmem [resolvable:$true] %s188
          %191 = dma.hbm_to_vmem [thread:$0]  %s187, 64, %s189, [#allocation7]
        $region20: #{tpu_custom_call.1} parent=11 // pred_fallthru
          _
        // Predicated region
        $region21: #{tpu_custom_call.1} parent=11 // pred_check
          %p192 = pneg %p80
        $region22: #{tpu_custom_call.1} parent=11 // pred_check_branch
          %194 = sbr.rel (%p192) target = $region24
        $region23: #{tpu_custom_call.1} parent=11 // pred_region
          _
        $region24: #{tpu_custom_call.1} parent=11 // pred_fallthru
          _
        // Predicated region
        $region25: #{tpu_custom_call.1} parent=11 // pred_check
          %p195 = pneg %p101
        $region26: #{tpu_custom_call.1} parent=11 // pred_check_branch
          %197 = sbr.rel (%p195) target = $region28
        $region27: #{tpu_custom_call.1} parent=11 // pred_region
          _
        $region28: #{tpu_custom_call.1} parent=11 // pred_fallthru
          _
      $region12: #{tpu_custom_call.1} parent=5 // pred_fallthru
        _
      %p198 = scmp.lt.s32.totalorder %s17, 2
      // Predicated region
      $region29: #{tpu_custom_call.1} parent=5 // pred_check
        %p199 = pneg %p198
      $region30: #{tpu_custom_call.1} parent=5 // pred_check_branch
        %201 = sbr.rel (%p199) target = $region32
      $region31: #{tpu_custom_call.1} parent=5 // pred_region
        // Predicated region
        $region33: #{tpu_custom_call.1} parent=31 // pred_check
          %p202 = pneg %p121
        $region34: #{tpu_custom_call.1} parent=31 // pred_check_branch
          %204 = sbr.rel (%p202) target = $region36
        $region35: #{tpu_custom_call.1} parent=31 // pred_region
          %s205 = sand.u32 %s17, 1
          %s206 = scalar_lea.sflag [#allocation4], %s205
          %s207 = sand.u32 %s111, 1
          %s208 = smul.addr %s207, 16
          %s209 = scalar_lea.vmem [#allocation8], %s208
          %s210 = smul.u32 2, %s17
          %212 = vsyncadd %s206, 0
          %s213 = smul.addr %s210, 2
          %s214 = smul.addr %s213, 4
          %s215 = scalar_lea.hbm %s4, %s214
          %s216 = sshll.u32 %s215, 4
          %s217 = int_to_ptr.hbm [resolvable:$true] %s216
          %s218 = sshll.u32 %s209, 4
          %s219 = int_to_ptr.vmem [resolvable:$true] %s218
          %224 = dma.hbm_to_vmem [thread:$0]  %s217, 256, %s219, %s206, 64, 64, 4
        $region36: #{tpu_custom_call.1} parent=31 // pred_fallthru
          _
      $region32: #{tpu_custom_call.1} parent=5 // pred_fallthru
        _
      %p225 = scmp.le.s32.totalorder 1, %s17
      %p226 = scmp.lt.s32.totalorder %s17, 3
      %p227 = pnand %p225, %p226
      %p228 = pneg %p227
      // Predicated region
      $region37: #{tpu_custom_call.1} parent=5 // pred_check
        _
      $region38: #{tpu_custom_call.1} parent=5 // pred_check_branch
        %230 = sbr.rel (%p227) target = $region40
      $region39: #{tpu_custom_call.1} parent=5 // pred_region
        %s231 = ssub.s32 %s17, 1
        // Predicated region
        $region41: #{tpu_custom_call.1} parent=39 // pred_check
          %p232 = pneg %p38
        $region42: #{tpu_custom_call.1} parent=39 // pred_check_branch
          %234 = sbr.rel (%p232) target = $region44
        $region43: #{tpu_custom_call.1} parent=39 // pred_region
          %236 = dma.done [#allocation4], 64
        $region44: #{tpu_custom_call.1} parent=39 // pred_fallthru
          _
        // Predicated region
        $region45: #{tpu_custom_call.1} parent=39 // pred_check
          %p237 = pneg %p59
        $region46: #{tpu_custom_call.1} parent=39 // pred_check_branch
          %239 = sbr.rel (%p237) target = $region48
        $region47: #{tpu_custom_call.1} parent=39 // pred_region
          %241 = dma.done [#allocation7], 64
        $region48: #{tpu_custom_call.1} parent=39 // pred_fallthru
          _
        %s242 = sand.u32 %s22, 1
        %s243 = scalar_lea.sflag [#allocation4], %s242
        %s244 = sand.u32 %s114, 1
        %s245 = smul.addr %s244, 16
        %s246 = scalar_lea.vmem [#allocation8], %s245
        // Predicated region
        $region49: #{tpu_custom_call.1} parent=39 // pred_check
          %p247 = pneg %p127
        $region50: #{tpu_custom_call.1} parent=39 // pred_check_branch
          %249 = sbr.rel (%p247) target = $region52
        $region51: #{tpu_custom_call.1} parent=39 // pred_region
          %251 = dma.done %s243, 256
        $region52: #{tpu_custom_call.1} parent=39 // pred_fallthru
          _
        %p252 = pneg %p38
        %p253 = pneg %p35
        %p254 = pneg %p59
        %p255 = pneg %p56
        %p256 = pneg %p80
        %p257 = pneg %p77
        %p258 = pneg %p101
        %p259 = pneg %p98
        %s260 = sand.u32 %s22, 1
        %s261 = scalar_lea.sflag [#allocation4], %s260
        %s262 = sand.u32 %s114, 1
        %s263 = smul.addr %s262, 16
        %s264 = scalar_lea.vmem [#allocation8], %s263
        %p265 = pneg %p127
        %p266 = pneg %p124
        %p267 = pneg %p153
        %p268 = pneg %p150
        %s269 = sand.u32 %s140, 1
        %s270 = scalar_lea.sflag [#allocation5], %s269
        %s271 = sand.u32 %s140, 1
        %s272 = smul.addr %s271, 2
        %s273 = scalar_lea.vmem [#allocation9], %s272
        %s274 = smul.u32 2, %s22
        %s275 = smul.u32 2, %s22
        %v276 = vld [vmem:[%s2] sm:$0x1]
        %s277 = sld [smem:[#allocation2]]
        %v278 = vlaneseq
        %v279 = vshrl.u32 %v278, 7
        %v280 = vadd.s32 %v279, 8
        %s281 = smul.u32 %s22, 2
        %v282 = vld [vmem:[%s246] sm:$0xf]
        %v283 = vld [vmem:[%s246 + $0x4] sm:$0xf]
        %v284 = vunpack.c.l.bf16 %v282
        %v285 = vunpack.c.l.bf16 %v283
        %v287 = vperm.slane %v276, 0
        %v289 = vmul.f32 %v284, %v287
        %v290 = vmul.f32 %v285, %v287
        %vm291 = vcmask 261120
        %v292 = vsel %vm291, %v289, 0.0
        %293 = vadd.xlane.f32.xlu0 %v292
        %v294 = vpop.xlane.xlu0 %293
        %v295 = vsel %vm291, %v290, 0.0
        %296 = vadd.xlane.f32.xlu0 %v295
        %v297 = vpop.xlane.xlu0 %296
        %s298 = scalar_lea.vmem [#allocation3], %s281
        %v299 = vld [vmem:[%s298] sm:$0x1]
        %s300 = scalar_lea.vmem [#allocation6], %s281
        %v301 = vld [vmem:[%s300] sm:$0x1]
        %v302 = vperm.slane %v299, 0
        %vm303 = vcmp.ge.s32.totalorder %v279, %v302
        %vm304 = vcmp.ge.s32.totalorder %v280, %v302
        %v305 = vadd.s32 %v299, %v301
        %v306 = vperm.slane %v305, 0
        %vm307 = vcmp.lt.s32.totalorder %v279, %v306
        %vm308 = vcmp.lt.s32.totalorder %v280, %v306
        %vm309 = vmand %vm303, %vm307
        %vm310 = vmand %vm304, %vm308
        %vm311 = vcmp.gt.s32.totalorder %v301, 0
        %v312 = vsel %vm311, 1, 0
        %v313 = vperm.slane %v312, 0
        %vm314 = vcmp.eq.s32.totalorder %v313, 1
        %vm315 = vmand %vm309, %vm314
        %vm316 = vmand %vm310, %vm314
        %vm317 = vcmp.gt.s32.totalorder %v301, 1
        %v318 = vsel %vm317, %v301, 1
        %v319 = vcvt.s32.f32 %v318
        %v320 = vrcp.pop %v319
        %v321 = vmul.f32 %v319, %v320
        %v322 = vsub.f32 1.0, %v321
        %v323 = vmul.f32 %v320, %v322
        %v324 = vadd.f32 %v320, %v323
        %vm325 = vweird.f32 %v319
        %vm326 = vweird.f32 %v320
        %vm327 = vmor %vm325, %vm326
        %v328 = vsel %vm327, %v320, %v324
        %v329 = vand.u32 2147483647, %v319
        %vm330 = vcmp.eq.f32.partialorder %v329, 8.507059e+37
        %v331 = vand.u32 %v319, 2147483648
        %v332 = vor.u32 1.1754944e-38, %v331
        %v333 = vsel %vm330, %v332, %v328
        %v334 = vmul.f32 1.0, %v333
        %v335 = vsel %vm315, 1, 0
        %v336 = vsel %vm316, 1, 0
        %v337 = vcvt.s32.f32 %v335
        %v338 = vcvt.s32.f32 %v336
        %v339 = vperm.slane %v334, 0
        %v340 = vmul.f32 %v337, %v339
        %v341 = vmul.f32 %v338, %v339
        %v342 = vmul.f32 %v340, %v294
        %v343 = vmul.f32 %v341, %v297
        %vm344 = vcmask 64512
        %v345 = vsel %vm344, %v342, 0.0
        %v346 = vsel %vm344, %v343, 0.0
        %v347 = vadd.f32 %v345, %v346
        %v348 = vrot.slane %v347, 4
        %v349 = vadd.f32 %v347, %v348
        %v350 = vrot.slane %v349, 2
        %v351 = vadd.f32 %v349, %v350
        %v352 = vrot.slane %v351, 1
        %v353 = vadd.f32 %v351, %v352
        %v354 = vstv %s277
        %v355 = vadd.f32 %v353, %v354
        %vm356 = vcmask 57344
        %357 = vst.msk [vmem:[%s273] sm:$0x1] %vm356, %v355
        %s358 = sadd.s32 %s281, 1
        %s359 = scalar_lea.vmem %s246, 8 [#allocation8]
        %v360 = vld [vmem:[%s359] sm:$0xf]
        %v361 = vld [vmem:[%s359 + $0x4] sm:$0xf]
        %v362 = vunpack.c.l.bf16 %v360
        %v363 = vunpack.c.l.bf16 %v361
        %v364 = vmul.f32 %v362, %v287
        %v365 = vmul.f32 %v363, %v287
        %v366 = vsel %vm291, %v364, 0.0
        %367 = vadd.xlane.f32.xlu0 %v366
        %v368 = vpop.xlane.xlu0 %367
        %v369 = vsel %vm291, %v365, 0.0
        %370 = vadd.xlane.f32.xlu0 %v369
        %v371 = vpop.xlane.xlu0 %370
        %s372 = scalar_lea.vmem [#allocation3], %s358
        %v373 = vld [vmem:[%s372] sm:$0x1]
        %s374 = scalar_lea.vmem [#allocation6], %s358
        %v375 = vld [vmem:[%s374] sm:$0x1]
        %v376 = vperm.slane %v373, 0
        %vm377 = vcmp.ge.s32.totalorder %v279, %v376
        %vm378 = vcmp.ge.s32.totalorder %v280, %v376
        %v379 = vadd.s32 %v373, %v375
        %v380 = vperm.slane %v379, 0
        %vm381 = vcmp.lt.s32.totalorder %v279, %v380
        %vm382 = vcmp.lt.s32.totalorder %v280, %v380
        %vm383 = vmand %vm377, %vm381
        %vm384 = vmand %vm378, %vm382
        %vm385 = vcmp.gt.s32.totalorder %v375, 0
        %v386 = vsel %vm385, 1, 0
        %v387 = vperm.slane %v386, 0
        %vm388 = vcmp.eq.s32.totalorder %v387, 1
        %vm389 = vmand %vm383, %vm388
        %vm390 = vmand %vm384, %vm388
        %vm391 = vcmp.gt.s32.totalorder %v375, 1
        %v392 = vsel %vm391, %v375, 1
        %v393 = vcvt.s32.f32 %v392
        %v394 = vrcp.pop %v393
        %v395 = vmul.f32 %v393, %v394
        %v396 = vsub.f32 1.0, %v395
        %v397 = vmul.f32 %v394, %v396
        %v398 = vadd.f32 %v394, %v397
        %vm399 = vweird.f32 %v393
        %vm400 = vweird.f32 %v394
        %vm401 = vmor %vm399, %vm400
        %v402 = vsel %vm401, %v394, %v398
        %v403 = vand.u32 2147483647, %v393
        %vm404 = vcmp.eq.f32.partialorder %v403, 8.507059e+37
        %v405 = vand.u32 %v393, 2147483648
        %v406 = vor.u32 1.1754944e-38, %v405
        %v407 = vsel %vm404, %v406, %v402
        %v408 = vmul.f32 1.0, %v407
        %v409 = vsel %vm389, 1, 0
        %v410 = vsel %vm390, 1, 0
        %v411 = vcvt.s32.f32 %v409
        %v412 = vcvt.s32.f32 %v410
        %v413 = vperm.slane %v408, 0
        %v414 = vmul.f32 %v411, %v413
        %v415 = vmul.f32 %v412, %v413
        %v416 = vmul.f32 %v414, %v368
        %v417 = vmul.f32 %v415, %v371
        %v418 = vsel %vm344, %v416, 0.0
        %v419 = vsel %vm344, %v417, 0.0
        %v420 = vadd.f32 %v418, %v419
        %v421 = vrot.slane %v420, 4
        %v422 = vadd.f32 %v420, %v421
        %v423 = vrot.slane %v422, 2
        %v424 = vadd.f32 %v422, %v423
        %v425 = vrot.slane %v424, 1
        %v426 = vadd.f32 %v424, %v425
        %v427 = vadd.f32 %v426, %v354
        %s428 = scalar_lea.vmem %s273, 1 [#allocation9]
        %429 = vst.msk [vmem:[%s428] sm:$0x1] %vm356, %v427
        %s430 = sand.u32 %s140, 1
        %s431 = scalar_lea.sflag [#allocation5], %s430
        %s432 = sand.u32 %s140, 1
        %s433 = smul.addr %s432, 2
        %s434 = scalar_lea.vmem [#allocation9], %s433
        // Predicated region
        $region53: #{tpu_custom_call.1} parent=39 // pred_check
          %p435 = pneg %p150
        $region54: #{tpu_custom_call.1} parent=39 // pred_check_branch
          %437 = sbr.rel (%p435) target = $region56
        $region55: #{tpu_custom_call.1} parent=39 // pred_region
          %s438 = smul.u32 2, %s22
          %440 = vsyncadd %s431, 0
          %s441 = scalar_lea.hbm %s5, %s438
          %s442 = sshll.u32 %s434, 4
          %s443 = int_to_ptr.vmem [resolvable:$true] %s442
          %s444 = sshll.u32 %s441, 4
          %s445 = int_to_ptr.hbm [resolvable:$true] %s444
          %450 = dma.vmem_to_hbm [thread:$0]  %s443, 32, %s445, %s431, 16, 16, 1
        $region56: #{tpu_custom_call.1} parent=39 // pred_fallthru
          _
      $region40: #{tpu_custom_call.1} parent=5 // pred_fallthru
        _
      %p451 = scmp.le.s32.totalorder 2, %s17
      // Predicated region
      $region57: #{tpu_custom_call.1} parent=5 // pred_check
        %p452 = pneg %p451
      $region58: #{tpu_custom_call.1} parent=5 // pred_check_branch
        %454 = sbr.rel (%p452) target = $region60
      $region59: #{tpu_custom_call.1} parent=5 // pred_region
        %s455 = ssub.s32 %s17, 2
        // Predicated region
        $region61: #{tpu_custom_call.1} parent=59 // pred_check
          %p456 = pneg %p156
        $region62: #{tpu_custom_call.1} parent=59 // pred_check_branch
          %458 = sbr.rel (%p456) target = $region64
        $region63: #{tpu_custom_call.1} parent=59 // pred_region
          %s459 = sand.u32 %s141, 1
          %s460 = scalar_lea.sflag [#allocation5], %s459
          %s461 = sand.u32 %s141, 1
          %s462 = smul.addr %s461, 2
          %s463 = scalar_lea.vmem [#allocation9], %s462
          %465 = dma.done %s460, 32
        $region64: #{tpu_custom_call.1} parent=59 // pred_fallthru
          _
      $region60: #{tpu_custom_call.1} parent=5 // pred_fallthru
        _
    $region6: #{tpu_custom_call.1} parent=1 // loop_footer
      %s21 = sadd.s32 1, %s17
    $region7: #{tpu_custom_call.1} parent=1 // loop_footer_branch
      %16 = sbr.rel target = $region3
    $region8: #{tpu_custom_call.1} parent=1 // loop_exit
      _
    %466 = vsyncpa [#allocation4], 1
    %s467 = scalar_lea.sflag [#allocation4], 1
    %468 = vsyncpa %s467, 1
    %469 = vsyncpa [#allocation7], 1
    %470 = vsyncpa [#allocation5], 1
    %s471 = scalar_lea.sflag [#allocation5], 1
    %472 = vsyncpa %s471, 1

</llo_original>
